<compile_context>
chip_gen: v5e
topology: v5e:2x2
jax: 0.10.0
libtpu: 0.0.40
codegen_flags: <defaults>
</compile_context>

<pallas_src>
import math

import jax
import jax.numpy as jnp
from jax.experimental import pallas as pl
from jax.experimental.pallas import tpu as pltpu


def _feature_noise_kernel(x_ref, scale_ref, o_ref):
    # scale = 1 + noise (f32), shape (1, tile_n) -> sublane-broadcast over x.
    # 1 vld + 1 broadcast-vmul + 1 vst per vreg; no VLIW slot near saturation,
    # so the body is intentionally left alone (HBM-bound).
    x = x_ref[...].astype(jnp.float32)
    o_ref[...] = (x * scale_ref[...]).astype(o_ref.dtype)


def _sample_noise(key, feat_shape, uniform_range):
    return jax.random.uniform(
        key, feat_shape, dtype=jnp.float32,
        minval=-uniform_range, maxval=uniform_range)


def _vmem_capacity_bytes():
    """Per-core VMEM capacity; conservative (v7x) default if the query fails."""
    try:
        return int(pltpu.get_tpu_info().vmem_capacity_bytes)
    except Exception:
        return 64 * 1024 * 1024


def _choose_tiles(b, n, itemsize, target_block_bytes):
    """Fixed, aligned tiles; ragged tails are handled by a cdiv grid + masking."""
    # Sublane packing: 8 rows (f32), 16 (bf16/f16), 32 (int8/fp8).
    sub = max(8, 32 // max(1, itemsize))

    # Lane tile: full n if it fits the block budget at the minimal row count,
    # otherwise the largest 128-multiple that does (keeps stores unmasked).
    min_rows = b if b < sub else sub
    max_tn = max(128, target_block_bytes // max(1, min_rows * itemsize))
    if n <= max_tn:
        tile_n = n                      # full lane dim (allowed even if not %128)
    else:
        tile_n = max(128, max_tn - max_tn % 128)

    # Batch tile: fill the remaining block budget, aligned to the sublane pack.
    if b <= sub:
        tile_b = b                      # full batch dim (allowed even if not %8)
    else:
        max_tb = max(sub, target_block_bytes // max(1, tile_n * itemsize))
        if b <= max_tb:
            tile_b = b                  # whole batch fits -> full dim
        else:
            tile_b = max(sub, max_tb - max_tb % sub)
    return tile_b, tile_n


def feature_noise(x, key, uniform_range=0.3, noise=None, donate_x=False):
    """x: (B, ...). Returns x * noise + x with noise ~ U(-r, r) of shape
    x.shape[1:], broadcast over the batch dim (matches the PyTorch module)."""
    b = x.shape[0]
    feat_shape = x.shape[1:]
    n = math.prod(feat_shape)
    xf = x.reshape(b, n)

    if noise is None:
        noise = _sample_noise(key, feat_shape, uniform_range)
    # Fold x*noise + x into one multiply: scale = 1 + noise. Kept in float32 so
    # low-precision activations do not quantize the noise before the multiply.
    scale = (jnp.float32(1.0) + noise.astype(jnp.float32)).reshape(1, n)

    itemsize = jnp.dtype(x.dtype).itemsize
    cap = _vmem_capacity_bytes()
    # Generation-aware block budget: tighter on 64 MiB-VMEM parts (v7x),
    # roomier on 128 MiB parts (v5e/v6e).
    target_block_bytes = (4 << 20) if cap <= (64 << 20) else (8 << 20)
    tile_b, tile_n = _choose_tiles(b, n, itemsize, target_block_bytes)

    grid_n = pl.cdiv(n, tile_n)
    grid_b = pl.cdiv(b, tile_b)
    # Lane-tile axis outermost: the (1, tile_n) scale block index is constant
    # across the inner (batch) steps so it stays resident in VMEM, and the long
    # outer parallel axis gives the megacore split something to shard.
    grid = (grid_n, grid_b)

    block_bytes = tile_b * tile_n * itemsize
    footprint = 2 * (2 * block_bytes) + 2 * tile_n * 4   # dbl-buffered in/out + scale
    vmem_limit = int(min(3 * cap // 4, max(32 << 20, 2 * footprint)))
    vmem_limit = int(min(max(vmem_limit, footprint + (4 << 20)), 3 * cap // 4))

    cost = pl.CostEstimate(
        flops=b * n,
        transcendentals=0,
        bytes_accessed=2 * b * n * itemsize + n * 4,
    )

    out = pl.pallas_call(
        _feature_noise_kernel,
        out_shape=jax.ShapeDtypeStruct((b, n), x.dtype),
        grid=grid,
        in_specs=[
            pl.BlockSpec((tile_b, tile_n), lambda i, j: (j, i)),   # x
            pl.BlockSpec((1, tile_n), lambda i, j: (0, i)),        # scale (f32, bcast over batch)
        ],
        out_specs=pl.BlockSpec((tile_b, tile_n), lambda i, j: (j, i)),
        compiler_params=pltpu.CompilerParams(
            dimension_semantics=("parallel", "parallel"),
            vmem_limit_bytes=vmem_limit,
        ),
        cost_estimate=cost,
        input_output_aliases={0: 0} if donate_x else {},
    )(xf, scale)

    return out.reshape(x.shape)


if __name__ == "__main__":
    B, C, H, W = 2, 4, 16, 16
    key = jax.random.PRNGKey(0)
    kx, kn = jax.random.split(key)
    x = jax.random.normal(kx, (B, C, H, W), dtype=jnp.float32)

    r = 0.3
    noise = _sample_noise(kn, (C, H, W), r)

    out = feature_noise(x, kn, uniform_range=r, noise=noise)
    out = jax.block_until_ready(out)

    # Reference: x * noise + x with the same noise, broadcast over batch.
    ref = x * noise[None] + x
    assert out.shape == x.shape
    assert bool(jnp.allclose(out, ref, rtol=1e-5, atol=1e-6)), "mismatch vs reference"

    # Noise is in [-r, r) and identical for every batch element.
    ratio0 = out[0] / jnp.where(jnp.abs(x[0]) < 1e-6, 1.0, x[0]) - 1.0
    ratio1 = out[1] / jnp.where(jnp.abs(x[1]) < 1e-6, 1.0, x[1]) - 1.0
    m = (jnp.abs(x[0]) >= 1e-6) & (jnp.abs(x[1]) >= 1e-6)
    assert bool(jnp.all(jnp.where(m, jnp.abs(ratio0), 0.0) <= r + 1e-5)), "noise out of range"
    assert bool(jnp.all(jnp.where(m, jnp.abs(ratio0 - ratio1), 0.0) <= 1e-4)), \
        "noise not broadcast across batch"

    # bf16 path: scale stays f32, multiply in f32, cast only the output.
    x_bf = x.astype(jnp.bfloat16)
    out_bf = jax.block_until_ready(
        feature_noise(x_bf, kn, uniform_range=r, noise=noise))
    ref_bf = (x_bf.astype(jnp.float32) * (1.0 + noise)[None]).astype(jnp.bfloat16)
    assert out_bf.dtype == jnp.bfloat16
    assert bool(jnp.allclose(out_bf.astype(jnp.float32), ref_bf.astype(jnp.float32),
                             rtol=2e-2, atol=2e-2)), "bf16 mismatch vs reference"

    print("KERNEL_OK")
</pallas_src>

<mosaic_0001>
module attributes {stable_mosaic.version = 11 : i64} {
  func.func @_feature_noise_kernel(%arg0: i32, %arg1: i32, %arg2: memref<2x1024xf32, #tpu.memory_space<vmem>>, %arg3: memref<1x1024xf32, #tpu.memory_space<vmem>>, %arg4: memref<2x1024xf32, #tpu.memory_space<vmem>>) attributes {dimension_semantics = [#tpu.dimension_semantics<parallel>, #tpu.dimension_semantics<parallel>], iteration_bounds = array<i64: 1, 1>, scalar_prefetch = 0 : i64, scratch_operands = 0 : i64, tpu.core_type = #tpu.core_type<tc>, window_params = [{transform_indices = @transform_0, window_bounds = array<i64: 2, 1024>}, {transform_indices = @transform_1, window_bounds = array<i64: 1, 1024>}, {transform_indices = @transform_2, window_bounds = array<i64: 2, 1024>}]} {
    %c0 = arith.constant 0 : index
    %c0_0 = arith.constant 0 : index
    %0 = vector.load %arg2[%c0, %c0_0] : memref<2x1024xf32, #tpu.memory_space<vmem>>, vector<2x1024xf32>
    %c0_1 = arith.constant 0 : index
    %c0_2 = arith.constant 0 : index
    %1 = vector.load %arg3[%c0_1, %c0_2] : memref<1x1024xf32, #tpu.memory_space<vmem>>, vector<1x1024xf32>
    %2 = vector.broadcast %1 : vector<1x1024xf32> to vector<2x1024xf32>
    %3 = arith.mulf %0, %2 : vector<2x1024xf32>
    %c0_3 = arith.constant 0 : index
    %c0_4 = arith.constant 0 : index
    %4 = vector.load %arg4[%c0_3, %c0_4] : memref<2x1024xf32, #tpu.memory_space<vmem>>, vector<2x1024xf32>
    tpu.vector_store %arg4[%c0_3, %c0_4], %3 {strides = array<i32>} : memref<2x1024xf32, #tpu.memory_space<vmem>>, vector<2x1024xf32>,
    return
  }
  func.func @transform_0(%arg0: i32, %arg1: i32) -> (i32, i32) {
    %c0_i32 = arith.constant 0 : i32
    return %arg1, %arg0 : i32, i32
  }
  func.func @transform_1(%arg0: i32, %arg1: i32) -> (i32, i32) {
    %c0_i32 = arith.constant 0 : i32
    %c0_i32_0 = arith.constant 0 : i32
    return %c0_i32, %arg0 : i32, i32
  }
  func.func @transform_2(%arg0: i32, %arg1: i32) -> (i32, i32) {
    %c0_i32 = arith.constant 0 : i32
    return %arg1, %arg0 : i32, i32
  }
}

</mosaic_0001>

<llo_original>
// kernel: tpu_custom_call.1
$region0: #{tpu_custom_call.1}
  #allocation0 [shape = 'u32[]', space=smem, size = 0x4, offset = 0x4, fixed_abs, tag = 'smem constant byte address 0x4 - core index']
  #allocation1 [shape = 'u32[72,128]{1,0:T(1,128)}', space=vmem, size = 0x9000, scoped, tag = 'internal scratch']
  %s0 = inlined_call_operand.hbm [shape: f32[2,1024], index: 0, kind: input, shape index: {}]
  %s1 = inlined_call_operand.hbm [shape: f32[1,1024], index: 1, kind: input, shape index: {}]
  %s2 = inlined_call_operand.hbm [shape: f32[2,1024], index: 2, kind: output, shape index: {}]
  %s3 = sld [smem:[#allocation0]]
  $region26: #{tpu_custom_call.1} parent=0
    _
  %s5 = ssub.s32 1, %s3
  %s6 = scalar_select 0, %s5, %s3
  $region1: #{tpu_custom_call.1} parent=0
    #allocation2 [shape = 'u8[8192]{0}', space=vmem, size = 0x2000, scoped, tag = 'input window, operand 0, single buffered']
    #allocation3 [shape = 's32[1]{0}', space=sflag, size = 0x4, scoped, tag = 'scoped memory for tpu_custom_call.1']
    #allocation4 [shape = 's32[1]{0}', space=sflag, size = 0x4, scoped, tag = 'scoped memory for tpu_custom_call.1']
    #allocation5 [shape = 'u8[4096]{0}', space=vmem, size = 0x1000, scoped, tag = 'input window, operand 1, single buffered']
    #allocation6 [shape = 's32[1]{0}', space=sflag, size = 0x4, scoped, tag = 'scoped memory for tpu_custom_call.1']
    #allocation7 [shape = 'u8[8192]{0}', space=vmem, size = 0x2000, scoped, tag = 'output window, operand 0, single buffered']
    %7 = vsyncpa [#allocation3], 0
    %8 = vsyncpa [#allocation6], 0
    %9 = vsyncpa [#allocation4], 0
    // Predicated region
    $region2: #{tpu_custom_call.1} parent=1 // pred_check
      _
    $region3: #{tpu_custom_call.1} parent=1 // pred_check_branch
      %11 = sbr.rel (0) target = $region5
    $region4: #{tpu_custom_call.1} parent=1 // pred_region
      %13 = vsyncadd [#allocation3], 0
      %s15 = sshll.u32 %s0, 4
      %s16 = int_to_ptr.hbm [resolvable:$true] %s15
      %s17 = sshll.u32 [#allocation2], 4
      %s18 = int_to_ptr.vmem [resolvable:$true] %s17
      %20 = dma.hbm_to_vmem [thread:$0]  %s16, 256, %s18, [#allocation3]
    $region5: #{tpu_custom_call.1} parent=1 // pred_fallthru
      _
    // Predicated region
    $region6: #{tpu_custom_call.1} parent=1 // pred_check
      _
    $region7: #{tpu_custom_call.1} parent=1 // pred_check_branch
      %22 = sbr.rel (0) target = $region9
    $region8: #{tpu_custom_call.1} parent=1 // pred_region
      %24 = vsyncadd [#allocation6], 0
      %s26 = sshll.u32 %s1, 4
      %s27 = int_to_ptr.hbm [resolvable:$true] %s26
      %s28 = sshll.u32 [#allocation5], 4
      %s29 = int_to_ptr.vmem [resolvable:$true] %s28
      %31 = dma.hbm_to_vmem [thread:$0]  %s27, 128, %s29, [#allocation6]
    $region9: #{tpu_custom_call.1} parent=1 // pred_fallthru
      _
    // Predicated region
    $region10: #{tpu_custom_call.1} parent=1 // pred_check
      _
    $region11: #{tpu_custom_call.1} parent=1 // pred_check_branch
      %33 = sbr.rel (0) target = $region13
    $region12: #{tpu_custom_call.1} parent=1 // pred_region
      %35 = dma.done [#allocation3], 256
    $region13: #{tpu_custom_call.1} parent=1 // pred_fallthru
      _
    // Predicated region
    $region14: #{tpu_custom_call.1} parent=1 // pred_check
      _
    $region15: #{tpu_custom_call.1} parent=1 // pred_check_branch
      %37 = sbr.rel (0) target = $region17
    $region16: #{tpu_custom_call.1} parent=1 // pred_region
      %39 = dma.done [#allocation6], 128
    $region17: #{tpu_custom_call.1} parent=1 // pred_fallthru
      _
    %v40 = vld [vmem:[#allocation2] sm:$0xff]
    %v41 = vld [vmem:[#allocation2 + $0x8] sm:$0xff]
    %v42 = vld [vmem:[#allocation5] sm:$0xff]
    %v44 = vperm.slane %v42, 0
    %v45 = vperm.slane %v42, 1
    %v46 = vperm.slane %v42, 2
    %v47 = vperm.slane %v42, 3
    %v48 = vperm.slane %v42, 4
    %v49 = vperm.slane %v42, 5
    %v50 = vperm.slane %v42, 6
    %v51 = vperm.slane %v42, 7
    %v52 = vrot.slane %v45, 6
    %v53 = vrot.slane %v46, 4
    %v54 = vrot.slane %v47, 2
    %v55 = vrot.slane %v49, 6
    %v56 = vrot.slane %v50, 4
    %v57 = vrot.slane %v51, 2
    %vm58 = vcmask 1041408
    %v59 = vsel %vm58, %v44, %v52
    %vm60 = vcmask 1045508
    %v61 = vsel %vm60, %v53, %v54
    %vm62 = vcmask 1043456
    %v63 = vsel %vm62, %v59, %v61
    %v64 = vsel %vm58, %v48, %v55
    %v65 = vsel %vm60, %v56, %v57
    %v66 = vsel %vm62, %v64, %v65
    %v69 = vmul.f32 %v40, %v63
    %v70 = vmul.f32 %v41, %v66
    %71 = vst [vmem:[#allocation7] sm:$0xff] %v69
    %72 = vst [vmem:[#allocation7 + $0x8] sm:$0xff] %v70
    // Predicated region
    $region18: #{tpu_custom_call.1} parent=1 // pred_check
      _
    $region19: #{tpu_custom_call.1} parent=1 // pred_check_branch
      %74 = sbr.rel (0) target = $region21
    $region20: #{tpu_custom_call.1} parent=1 // pred_region
      %76 = vsyncadd [#allocation4], 0
      %s78 = sshll.u32 [#allocation7], 4
      %s79 = int_to_ptr.vmem [resolvable:$true] %s78
      %s80 = sshll.u32 %s2, 4
      %s81 = int_to_ptr.hbm [resolvable:$true] %s80
      %83 = dma.vmem_to_hbm [thread:$0]  %s79, 256, %s81, [#allocation4]
    $region21: #{tpu_custom_call.1} parent=1 // pred_fallthru
      _
    // Predicated region
    $region22: #{tpu_custom_call.1} parent=1 // pred_check
      _
    $region23: #{tpu_custom_call.1} parent=1 // pred_check_branch
      %85 = sbr.rel (0) target = $region25
    $region24: #{tpu_custom_call.1} parent=1 // pred_region
      %87 = dma.done [#allocation4], 256
    $region25: #{tpu_custom_call.1} parent=1 // pred_fallthru
      _
    %88 = vsyncpa [#allocation3], 1
    %89 = vsyncpa [#allocation6], 1
    %90 = vsyncpa [#allocation4], 1

</llo_original>
